<compile_context>
chip_gen: v6e
topology: v6e:2x2x1
jax: 0.10.0
libtpu: 0.0.40
codegen_flags: <defaults>
</compile_context>

<pallas_src>
import functools

import jax
import jax.numpy as jnp
from jax.experimental import pallas as pl
from jax.experimental.pallas import tpu as pltpu

LANE = 128
SUBLANE = 8
_MIB = 1024 * 1024
_VMEM_HEADROOM = 8 * _MIB  # margin for compiler-internal scratch / regalloc


def _round_up(x, m):
    return ((x + m - 1) // m) * m


# ----------------------------------------------------------------------------
# Kernels
# ----------------------------------------------------------------------------
def _ffn_kernel_stream(x_ref, w13_ref, w2_ref, o_ref, acc_ref, *, th):
    """Hidden dimension streamed over grid axis 1 (reduction, 'arbitrary').

    x_ref:   (tm, dim_p)    bf16 token tile (resident across hidden steps)
    w13_ref: (dim_p, 2*th)  bf16 fused [w1_j | w3_j] hidden tile (streamed)
    w2_ref:  (th, dim_p)    bf16 w2 hidden tile (streamed)
    o_ref:   (tm, dim_p)    output tile (written once, at last hidden step)
    acc_ref: (tm, dim_p)    f32 accumulator scratch
    """
    j = pl.program_id(1)

    x = x_ref[...]
    # One fused MXU pass over x for both gate and up projections.
    h = jnp.dot(x, w13_ref[...], preferred_element_type=jnp.float32)  # (tm, 2*th)
    h1 = h[:, :th]
    h3 = h[:, th:]
    gated = (h1 * jax.nn.sigmoid(h1)) * h3  # SiLU gate in f32
    partial = jnp.dot(
        gated.astype(w2_ref.dtype), w2_ref[...], preferred_element_type=jnp.float32
    )

    # Split accumulation: no zero-init store / zero read on the first step.
    @pl.when(j == 0)
    def _():
        acc_ref[...] = partial

    @pl.when(j > 0)
    def _():
        acc_ref[...] += partial

    @pl.when(j == pl.num_programs(1) - 1)
    def _():
        o_ref[...] = acc_ref[...].astype(o_ref.dtype)


def _ffn_kernel_resident(x_ref, w13_ref, w2_ref, o_ref, *, th):
    """Weights fully VMEM-resident; single grid axis over token tiles."""
    x = x_ref[...]
    h = jnp.dot(x, w13_ref[...], preferred_element_type=jnp.float32)
    h1 = h[:, :th]
    h3 = h[:, th:]
    gated = (h1 * jax.nn.sigmoid(h1)) * h3
    o_ref[...] = jnp.dot(
        gated.astype(w2_ref.dtype), w2_ref[...], preferred_element_type=jnp.float32
    ).astype(o_ref.dtype)


# ----------------------------------------------------------------------------
# Generation-aware planning
# ----------------------------------------------------------------------------
def _tpu_config():
    """Query VMEM capacity / TC count / default token tile per generation."""
    vmem_bytes = None
    try:
        vmem_bytes = int(pltpu.get_tpu_info().vmem_capacity_bytes)
    except Exception:  # older jax / interpret mode / attribute mismatch
        vmem_bytes = None

    kind = ""
    try:
        devs = jax.devices()
        if devs:
            kind = devs[0].device_kind.lower()
    except Exception:
        pass

    is_v7 = "v7" in kind
    is_v6 = "v6" in kind
    is_v5e = ("v5 lite" in kind) or ("v5e" in kind) or ("v5lite" in kind)
    is_mega = ("v4" in kind) or ("v5p" in kind)  # legacy 2-TC megacore chips

    if vmem_bytes is None:
        vmem_bytes = 64 * _MIB if is_v7 else 128 * _MIB

    if is_v7:
        # 2 TCs/chip, 64 MiB VMEM/TC: start at 512, the planner shrinks to 256
        # automatically when the full working set (incl. temporaries) won't fit.
        tm_default, cores = 512, 2
    elif is_v6:
        # ~680 flops/byte crossover -> tm=768 makes prefill MXU-bound.
        tm_default, cores = 768, 1
    elif is_v5e:
        # ~240 flops/byte crossover -> tm=256 already compute-bound.
        tm_default, cores = 256, 1
    elif is_mega:
        tm_default, cores = 512, 2
    else:
        tm_default, cores = (256, 2) if vmem_bytes <= 64 * _MIB else (512, 1)

    return dict(
        vmem_bytes=vmem_bytes,
        vmem_budget=int(vmem_bytes * 0.8),  # ~80% of physical
        tm_default=tm_default,
        cores=cores,
    )


def _stream_vmem_bytes(tm, th, dim_p, x_bytes, w_bytes, out_bytes):
    """VMEM needed by the streaming kernel, incl. internal temporaries."""
    blockspec = 2 * (
        tm * dim_p * x_bytes            # x tile (double-buffered)
        + dim_p * 2 * th * w_bytes      # fused w1|w3 tile
        + th * dim_p * w_bytes          # w2 tile
        + tm * dim_p * out_bytes        # output tile
    )
    temps = (
        tm * 2 * th * 4                 # h (f32 dot output)
        + tm * 2 * th * 4               # h1/h3 slice copies (conservative)
        + tm * th * 4                   # gated f32
        + tm * th * w_bytes             # gated cast for MXU
        + tm * dim_p * 4                # partial (f32 dot output)
    )
    acc = tm * dim_p * 4                # accumulator scratch
    return blockspec + temps + acc


def _resident_vmem_bytes(tm, hidden_p, dim_p, x_bytes, w_bytes, out_bytes):
    """VMEM needed by the weights-resident kernel, incl. temporaries."""
    blockspec = (
        2 * (tm * dim_p * x_bytes + tm * dim_p * out_bytes)
        + 2 * (dim_p * 2 * hidden_p + hidden_p * dim_p) * w_bytes
    )
    temps = (
        tm * 2 * hidden_p * 4 * 2       # h + slice copies
        + tm * hidden_p * (4 + w_bytes)  # gated f32 + bf16 copy
        + tm * dim_p * 4                 # final dot f32 output
    )
    return blockspec + temps


def plan_ffn(dim, hidden, *, out_dtype=jnp.float32, compute_dtype=jnp.bfloat16,
             th_max=1024):
    """One-time tiling plan (call once per model config, outside the hot path)."""
    cfg = _tpu_config()
    w_bytes = jnp.dtype(compute_dtype).itemsize
    x_bytes = w_bytes
    out_bytes = jnp.dtype(out_dtype).itemsize

    dim_p = _round_up(dim, LANE)
    hidden_p_full = _round_up(hidden, LANE)
    budget = cfg["vmem_budget"] - _VMEM_HEADROOM
    tm = cfg["tm_default"]

    # Fast path: whole prepared bf16 weight set resident in VMEM.
    if _resident_vmem_bytes(tm, hidden_p_full, dim_p, x_bytes, w_bytes,
                            out_bytes) <= budget:
        return dict(resident=True, th=hidden_p_full, tm_default=tm,
                    dim=dim, dim_p=dim_p, hidden=hidden, hidden_p=hidden_p_full,
                    compute_dtype=compute_dtype, out_dtype=out_dtype,
                    vmem_limit=cfg["vmem_budget"], cores=cfg["cores"])

    # Streaming path: largest (tm, th) that fits the budget (th multiple of 128).
    th_cap = max(LANE, min(_round_up(th_max, LANE), hidden_p_full))
    th = LANE
    while True:
        th_try = th_cap
        while th_try > LANE and _stream_vmem_bytes(
                tm, th_try, dim_p, x_bytes, w_bytes, out_bytes) > budget:
            th_try -= LANE
        fits = _stream_vmem_bytes(tm, th_try, dim_p, x_bytes, w_bytes,
                                  out_bytes) <= budget
        if fits or tm <= SUBLANE:
            th = th_try
            break
        tm = max(SUBLANE, _round_up(tm // 2, SUBLANE))

    hidden_p = _round_up(hidden, th)
    return dict(resident=False, th=th, tm_default=tm,
                dim=dim, dim_p=dim_p, hidden=hidden, hidden_p=hidden_p,
                compute_dtype=compute_dtype, out_dtype=out_dtype,
                vmem_limit=cfg["vmem_budget"], cores=cfg["cores"])


def prepare_ffn_weights(w1, w2, w3, plan):
    """One-time weight prep (transpose + fuse + pad + bf16) — keep out of hot path.

    w1, w3: (hidden, dim); w2: (dim, hidden)   [PyTorch Linear layout]
    Returns:
      w13: (dim_p, n_hid * 2 * th)  hidden-tile j occupies columns
           [j*2*th : (j+1)*2*th] = [w1_j | w3_j]
      w2t: (hidden_p, dim_p)
    """
    hidden, dim = w1.shape
    assert (hidden, dim) == (plan["hidden"], plan["dim"])
    dim_p, hidden_p, th = plan["dim_p"], plan["hidden_p"], plan["th"]
    cdt = plan["compute_dtype"]

    def pad2(a, rows, cols):
        return jnp.pad(a, ((0, rows - a.shape[0]), (0, cols - a.shape[1])))

    w1t = pad2(w1.T.astype(cdt), dim_p, hidden_p)    # (dim_p, hidden_p)
    w3t = pad2(w3.T.astype(cdt), dim_p, hidden_p)    # (dim_p, hidden_p)
    w2t = pad2(w2.T.astype(cdt), hidden_p, dim_p)    # (hidden_p, dim_p)

    n_hid = hidden_p // th
    w13 = jnp.concatenate(
        [w1t.reshape(dim_p, n_hid, th), w3t.reshape(dim_p, n_hid, th)], axis=2
    ).reshape(dim_p, n_hid * 2 * th)
    return w13, w2t


# ----------------------------------------------------------------------------
# Forward wrapper
# ----------------------------------------------------------------------------
def feed_forward(x, w13, w2t, plan):
    """x: [..., dim]; w13/w2t from prepare_ffn_weights(plan)."""
    dim, dim_p = plan["dim"], plan["dim_p"]
    hidden_p, th = plan["hidden_p"], plan["th"]
    cdt, out_dtype = plan["compute_dtype"], plan["out_dtype"]
    cores = plan["cores"]

    orig_shape = x.shape
    x2d = x.reshape(-1, dim)
    tokens = x2d.shape[0]

    # Token tile: generation default, clamped to the token count; on 2-TC chips
    # ensure at least `cores` token tiles so both TensorCores get work.
    tm = min(plan["tm_default"], _round_up(tokens, SUBLANE))
    if cores > 1 and tokens > SUBLANE:
        tm = min(tm, _round_up(pl.cdiv(tokens, cores), SUBLANE))
    tm = max(SUBLANE, _round_up(tm, SUBLANE))
    tokens_p = _round_up(tokens, tm)
    n_tok = tokens_p // tm
    n_hid = hidden_p // th
    resident = bool(plan["resident"]) and n_hid == 1

    # Skip the wrapper-side pad/cast copy when x is already tile-aligned bf16.
    needs_copy = (x2d.dtype != cdt) or (dim != dim_p) or (tokens_p != tokens)
    x_p = (jnp.pad(x2d, ((0, tokens_p - tokens), (0, dim_p - dim))).astype(cdt)
           if needs_copy else x2d)

    w_itemsize = jnp.dtype(cdt).itemsize
    out_itemsize = jnp.dtype(out_dtype).itemsize
    weight_bytes = (w13.size + w2t.size) * w_itemsize
    weight_passes = 1 if resident else n_tok  # streamed once per token tile
    cost = pl.CostEstimate(
        flops=int(6 * tokens_p * dim_p * hidden_p),
        transcendentals=int(tokens_p * hidden_p),
        bytes_accessed=int(x_p.size * w_itemsize
                           + weight_bytes * weight_passes
                           + tokens_p * dim_p * out_itemsize),
    )
    compiler_params = pltpu.CompilerParams(
        dimension_semantics=("parallel",) if resident else ("parallel", "arbitrary"),
        vmem_limit_bytes=int(plan["vmem_limit"]),
    )

    if resident:
        out = pl.pallas_call(
            functools.partial(_ffn_kernel_resident, th=th),
            out_shape=jax.ShapeDtypeStruct((tokens_p, dim_p), out_dtype),
            grid_spec=pltpu.PrefetchScalarGridSpec(
                num_scalar_prefetch=0,
                grid=(n_tok,),
                in_specs=[
                    pl.BlockSpec((tm, dim_p), lambda i: (i, 0)),
                    pl.BlockSpec((dim_p, 2 * th), lambda i: (0, 0)),   # resident
                    pl.BlockSpec((hidden_p, dim_p), lambda i: (0, 0)),  # resident
                ],
                out_specs=pl.BlockSpec((tm, dim_p), lambda i: (i, 0)),
            ),
            compiler_params=compiler_params,
            cost_estimate=cost,
        )(x_p, w13, w2t)
    else:
        out = pl.pallas_call(
            functools.partial(_ffn_kernel_stream, th=th),
            out_shape=jax.ShapeDtypeStruct((tokens_p, dim_p), out_dtype),
            grid_spec=pltpu.PrefetchScalarGridSpec(
                num_scalar_prefetch=0,
                grid=(n_tok, n_hid),                               # reduction last
                in_specs=[
                    pl.BlockSpec((tm, dim_p), lambda i, j: (i, 0)),      # x resident over j
                    pl.BlockSpec((dim_p, 2 * th), lambda i, j: (0, j)),  # w1|w3 stream
                    pl.BlockSpec((th, dim_p), lambda i, j: (j, 0)),      # w2 stream
                ],
                out_specs=pl.BlockSpec((tm, dim_p), lambda i, j: (i, 0)),
                scratch_shapes=[pltpu.VMEM((tm, dim_p), jnp.float32)],
            ),
            compiler_params=compiler_params,
            cost_estimate=cost,
        )(x_p, w13, w2t)

    return out[:tokens, :dim].reshape(orig_shape[:-1] + (dim,))


def llama_hidden_dim(dim, hidden_dim, multiple_of, ffn_dim_multiplier):
    hidden_dim = int(2 * hidden_dim / 3)
    if ffn_dim_multiplier is not None:
        hidden_dim = int(ffn_dim_multiplier * hidden_dim)
    hidden_dim = multiple_of * ((hidden_dim + multiple_of - 1) // multiple_of)
    return hidden_dim


if __name__ == "__main__":
    # Small config consistent with the module's __init__.
    dim = 64
    hidden_dim_in = 4 * dim          # LLaMA convention: 4*dim fed in
    multiple_of = 32
    ffn_dim_multiplier = None
    hidden = llama_hidden_dim(dim, hidden_dim_in, multiple_of, ffn_dim_multiplier)  # 192

    batch, seq = 2, 8
    key = jax.random.PRNGKey(0)
    kx, k1, k2, k3 = jax.random.split(key, 4)
    x = jax.random.normal(kx, (batch, seq, dim), dtype=jnp.float32)
    # Deterministic synthetic weights in PyTorch Linear layout (out, in).
    w1 = jax.random.normal(k1, (hidden, dim), dtype=jnp.float32) * 0.05
    w2 = jax.random.normal(k2, (dim, hidden), dtype=jnp.float32) * 0.05
    w3 = jax.random.normal(k3, (hidden, dim), dtype=jnp.float32) * 0.05

    # Pure-JAX reference (same bf16 rounding of inputs/weights, f32 math).
    xb = x.astype(jnp.bfloat16).astype(jnp.float32)
    w1b = w1.astype(jnp.bfloat16).astype(jnp.float32)
    w2b = w2.astype(jnp.bfloat16).astype(jnp.float32)
    w3b = w3.astype(jnp.bfloat16).astype(jnp.float32)
    h1 = xb @ w1b.T
    h3 = xb @ w3b.T
    ref = (h1 * jax.nn.sigmoid(h1) * h3) @ w2b.T

    # --- Default plan (this small model takes the weights-resident fast path).
    plan = plan_ffn(dim, hidden, out_dtype=jnp.float32)
    w13, w2t = prepare_ffn_weights(w1, w2, w3, plan)
    y = jax.block_until_ready(feed_forward(x, w13, w2t, plan))

    assert y.shape == x.shape
    assert y.dtype == x.dtype
    assert jnp.allclose(y, ref, atol=1e-2, rtol=2e-2), float(jnp.max(jnp.abs(y - ref)))

    # --- Also exercise the streaming (hidden-tiled, accumulator) path.
    plan_s = dict(plan)
    plan_s.update(resident=False, th=128, hidden_p=_round_up(hidden, 128),
                  tm_default=8)
    w13_s, w2t_s = prepare_ffn_weights(w1, w2, w3, plan_s)
    y_s = jax.block_until_ready(feed_forward(x, w13_s, w2t_s, plan_s))
    assert jnp.allclose(y_s, ref, atol=1e-2, rtol=2e-2), \
        float(jnp.max(jnp.abs(y_s - ref)))

    print("KERNEL_OK")
</pallas_src>

<mosaic_0001>
module attributes {stable_mosaic.version = 11 : i64} {
  func.func @_ffn_kernel_resident(%arg0: i32, %arg1: memref<16x128xbf16, #tpu.memory_space<vmem>>, %arg2: memref<128x512xbf16, #tpu.memory_space<vmem>>, %arg3: memref<256x128xbf16, #tpu.memory_space<vmem>>, %arg4: memref<16x128xf32, #tpu.memory_space<vmem>>) attributes {dimension_semantics = [#tpu.dimension_semantics<parallel>], iteration_bounds = array<i64: 1>, scalar_prefetch = 0 : i64, scratch_operands = 0 : i64, tpu.core_type = #tpu.core_type<tc>, window_params = [{transform_indices = @transform_0, window_bounds = array<i64: 16, 128>}, {pipeline_mode = #tpu.pipeline_mode<synchronous>, transform_indices = @transform_1, window_bounds = array<i64: 128, 512>}, {pipeline_mode = #tpu.pipeline_mode<synchronous>, transform_indices = @transform_2, window_bounds = array<i64: 256, 128>}, {transform_indices = @transform_3, window_bounds = array<i64: 16, 128>}]} {
    %c0 = arith.constant 0 : index
    %c0_0 = arith.constant 0 : index
    %0 = vector.load %arg1[%c0, %c0_0] : memref<16x128xbf16, #tpu.memory_space<vmem>>, vector<16x128xbf16>
    %c0_1 = arith.constant 0 : index
    %c0_2 = arith.constant 0 : index
    %1 = vector.load %arg2[%c0_1, %c0_2] : memref<128x512xbf16, #tpu.memory_space<vmem>>, vector<128x512xbf16>
    %cst = arith.constant dense<0.000000e+00> : vector<16x512xf32>
    %2 = tpu.matmul %0, %1, %cst {dimension_numbers = #tpu.dot_dimension_numbers<[1], [0], [0], [1], [0, 0, 1, 1], [], []>} : vector<16x128xbf16>, vector<128x512xbf16>, vector<16x512xf32> -> vector<16x512xf32>
    %3 = vector.extract_strided_slice %2 {offsets = [0, 0], sizes = [16, 256], strides = [1, 1]} : vector<16x512xf32> to vector<16x256xf32>
    %4 = vector.extract_strided_slice %2 {offsets = [0, 256], sizes = [16, 256], strides = [1, 1]} : vector<16x512xf32> to vector<16x256xf32>
    %5 = arith.negf %3 : vector<16x256xf32>
    %6 = math.exp %5 : vector<16x256xf32>
    %cst_3 = arith.constant 1.000000e+00 : f32
    %7 = vector.broadcast %cst_3 : f32 to vector<16x256xf32>
    %8 = arith.addf %7, %6 : vector<16x256xf32>
    %9 = arith.divf %7, %8 : vector<16x256xf32>
    %10 = arith.mulf %3, %9 : vector<16x256xf32>
    %11 = arith.mulf %10, %4 : vector<16x256xf32>
    %12 = arith.truncf %11 : vector<16x256xf32> to vector<16x256xbf16>
    %c0_4 = arith.constant 0 : index
    %c0_5 = arith.constant 0 : index
    %13 = vector.load %arg3[%c0_4, %c0_5] : memref<256x128xbf16, #tpu.memory_space<vmem>>, vector<256x128xbf16>
    %cst_6 = arith.constant dense<0.000000e+00> : vector<16x128xf32>
    %14 = tpu.matmul %12, %13, %cst_6 {dimension_numbers = #tpu.dot_dimension_numbers<[1], [0], [0], [1], [0, 0, 1, 1], [], []>} : vector<16x256xbf16>, vector<256x128xbf16>, vector<16x128xf32> -> vector<16x128xf32>
    %c0_7 = arith.constant 0 : index
    %c0_8 = arith.constant 0 : index
    %15 = vector.load %arg4[%c0_7, %c0_8] : memref<16x128xf32, #tpu.memory_space<vmem>>, vector<16x128xf32>
    tpu.vector_store %arg4[%c0_7, %c0_8], %14 {strides = array<i32>} : memref<16x128xf32, #tpu.memory_space<vmem>>, vector<16x128xf32>,
    return
  }
  func.func @transform_0(%arg0: i32) -> (i32, i32) {
    %c0_i32 = arith.constant 0 : i32
    %c0_i32_0 = arith.constant 0 : i32
    return %arg0, %c0_i32 : i32, i32
  }
  func.func @transform_1(%arg0: i32) -> (i32, i32) {
    %c0_i32 = arith.constant 0 : i32
    %c0_i32_0 = arith.constant 0 : i32
    %c0_i32_1 = arith.constant 0 : i32
    return %c0_i32, %c0_i32_0 : i32, i32
  }
  func.func @transform_2(%arg0: i32) -> (i32, i32) {
    %c0_i32 = arith.constant 0 : i32
    %c0_i32_0 = arith.constant 0 : i32
    %c0_i32_1 = arith.constant 0 : i32
    return %c0_i32, %c0_i32_0 : i32, i32
  }
  func.func @transform_3(%arg0: i32) -> (i32, i32) {
    %c0_i32 = arith.constant 0 : i32
    %c0_i32_0 = arith.constant 0 : i32
    return %arg0, %c0_i32 : i32, i32
  }
}

</mosaic_0001>

<llo_original>
// kernel: tpu_custom_call.1
$region0: #{tpu_custom_call.1}
  #allocation0 [shape = 'u32[]', space=smem, size = 0x4, offset = 0x4, fixed_abs, tag = 'smem constant byte address 0x4 - core index']
  #allocation1 [shape = 'u32[144,128]{1,0:T(1,128)}', space=vmem, size = 0x12000, scoped, tag = 'internal scratch']
  %s0 = inlined_call_operand.hbm [shape: bf16[16,128], index: 0, kind: input, shape index: {}]
  %s1 = inlined_call_operand.hbm [shape: bf16[128,512], index: 1, kind: input, shape index: {}]
  %s2 = inlined_call_operand.hbm [shape: bf16[256,128], index: 2, kind: input, shape index: {}]
  %s3 = inlined_call_operand.hbm [shape: f32[16,128], index: 3, kind: output, shape index: {}]
  %s4 = sld [smem:[#allocation0]]
  $region34: #{tpu_custom_call.1} parent=0
    _
  %s6 = ssub.s32 1, %s4
  %s7 = scalar_select 0, %s6, %s4
  $region1: #{tpu_custom_call.1} parent=0
    #allocation2 [shape = 'u8[4096]{0}', space=vmem, size = 0x1000, scoped, tag = 'input window, operand 0, single buffered']
    #allocation3 [shape = 's32[1]{0}', space=sflag, size = 0x4, scoped, tag = 'scoped memory for tpu_custom_call.1']
    #allocation4 [shape = 's32[1]{0}', space=sflag, size = 0x4, scoped, tag = 'scoped memory for tpu_custom_call.1']
    #allocation5 [shape = 'u8[131072]{0}', space=vmem, size = 0x20000, scoped, tag = 'input window, operand 1, single buffered']
    #allocation6 [shape = 's32[1]{0}', space=sflag, size = 0x4, scoped, tag = 'scoped memory for tpu_custom_call.1']
    #allocation7 [shape = 'u8[65536]{0}', space=vmem, size = 0x10000, scoped, tag = 'input window, operand 2, single buffered']
    #allocation8 [shape = 'u8[8192]{0}', space=vmem, size = 0x2000, scoped, tag = 'output window, operand 0, single buffered']
    %8 = vsyncpa [#allocation3], 0
    %9 = vsyncpa [#allocation6], 0
    %10 = vsyncpa [#allocation4], 0
    // Predicated region
    $region2: #{tpu_custom_call.1} parent=1 // pred_check
      _
    $region3: #{tpu_custom_call.1} parent=1 // pred_check_branch
      %12 = sbr.rel (0) target = $region5
    $region4: #{tpu_custom_call.1} parent=1 // pred_region
      %s14 = ssub.s32 128, 128
      %15 = vsyncadd [#allocation3], %s14
      %s16 = sshll.u32 [#allocation2], 4
      %s17 = int_to_ptr.vmem [resolvable:$true] %s16
      %22 = dma.hbm_to_vmem [thread:$0]  %s0, 128, %s17, [#allocation3], 64, 64, 4
    $region5: #{tpu_custom_call.1} parent=1 // pred_fallthru
      _
    // Predicated region
    $region6: #{tpu_custom_call.1} parent=1 // pred_check
      _
    $region7: #{tpu_custom_call.1} parent=1 // pred_check_branch
      %24 = sbr.rel (0) target = $region9
    $region8: #{tpu_custom_call.1} parent=1 // pred_region
      %s26 = ssub.s32 4096, 4096
      %27 = vsyncadd [#allocation6], %s26
      %s28 = sshll.u32 [#allocation5], 4
      %s29 = int_to_ptr.vmem [resolvable:$true] %s28
      %34 = dma.hbm_to_vmem [thread:$0]  %s1, 4096, %s29, [#allocation6], 256, 256, 16
    $region9: #{tpu_custom_call.1} parent=1 // pred_fallthru
      _
    // Predicated region
    $region10: #{tpu_custom_call.1} parent=1 // pred_check
      _
    $region11: #{tpu_custom_call.1} parent=1 // pred_check_branch
      %36 = sbr.rel (0) target = $region13
    $region12: #{tpu_custom_call.1} parent=1 // pred_region
      %s38 = ssub.s32 2048, 2048
      %39 = vsyncadd [#allocation6], %s38
      %s40 = sshll.u32 [#allocation7], 4
      %s41 = int_to_ptr.vmem [resolvable:$true] %s40
      %46 = dma.hbm_to_vmem [thread:$0]  %s2, 2048, %s41, [#allocation6], 64, 64, 4
    $region13: #{tpu_custom_call.1} parent=1 // pred_fallthru
      _
    // Predicated region
    $region14: #{tpu_custom_call.1} parent=1 // pred_check
      _
    $region15: #{tpu_custom_call.1} parent=1 // pred_check_branch
      %48 = sbr.rel (0) target = $region17
    $region16: #{tpu_custom_call.1} parent=1 // pred_region
      %49 = dma.done [#allocation3], 128
    $region17: #{tpu_custom_call.1} parent=1 // pred_fallthru
      _
    // Predicated region
    $region18: #{tpu_custom_call.1} parent=1 // pred_check
      _
    $region19: #{tpu_custom_call.1} parent=1 // pred_check_branch
      %51 = sbr.rel (0) target = $region21
    $region20: #{tpu_custom_call.1} parent=1 // pred_region
      %52 = dma.done [#allocation6], 4096
    $region21: #{tpu_custom_call.1} parent=1 // pred_fallthru
      _
    // Predicated region
    $region22: #{tpu_custom_call.1} parent=1 // pred_check
      _
    $region23: #{tpu_custom_call.1} parent=1 // pred_check_branch
      %54 = sbr.rel (0) target = $region25
    $region24: #{tpu_custom_call.1} parent=1 // pred_region
      %55 = dma.done [#allocation6], 2048
    $region25: #{tpu_custom_call.1} parent=1 // pred_fallthru
      _
    %v57 = vld [vmem:[#allocation2] sm:$0xf]
    %v58 = vld [vmem:[#allocation2 + $0x4] sm:$0xf]
    %v59 = vld [vmem:[#allocation5] sm:$0xff]
    %v60 = vld [vmem:[#allocation5 + $0x8] sm:$0xff]
    %v61 = vld [vmem:[#allocation5 + $0x10] sm:$0xff]
    %v62 = vld [vmem:[#allocation5 + $0x18] sm:$0xff]
    %v63 = vld [vmem:[#allocation5 + $0x20] sm:$0xff]
    %v64 = vld [vmem:[#allocation5 + $0x28] sm:$0xff]
    %v65 = vld [vmem:[#allocation5 + $0x30] sm:$0xff]
    %v66 = vld [vmem:[#allocation5 + $0x38] sm:$0xff]
    %v67 = vld [vmem:[#allocation5 + $0x40] sm:$0xff]
    %v68 = vld [vmem:[#allocation5 + $0x48] sm:$0xff]
    %v69 = vld [vmem:[#allocation5 + $0x50] sm:$0xff]
    %v70 = vld [vmem:[#allocation5 + $0x58] sm:$0xff]
    %v71 = vld [vmem:[#allocation5 + $0x60] sm:$0xff]
    %v72 = vld [vmem:[#allocation5 + $0x68] sm:$0xff]
    %v73 = vld [vmem:[#allocation5 + $0x70] sm:$0xff]
    %v74 = vld [vmem:[#allocation5 + $0x78] sm:$0xff]
    %v75 = vld [vmem:[#allocation5 + $0x80] sm:$0xff]
    %v76 = vld [vmem:[#allocation5 + $0x88] sm:$0xff]
    %v77 = vld [vmem:[#allocation5 + $0x90] sm:$0xff]
    %v78 = vld [vmem:[#allocation5 + $0x98] sm:$0xff]
    %v79 = vld [vmem:[#allocation5 + $0xa0] sm:$0xff]
    %v80 = vld [vmem:[#allocation5 + $0xa8] sm:$0xff]
    %v81 = vld [vmem:[#allocation5 + $0xb0] sm:$0xff]
    %v82 = vld [vmem:[#allocation5 + $0xb8] sm:$0xff]
    %v83 = vld [vmem:[#allocation5 + $0xc0] sm:$0xff]
    %v84 = vld [vmem:[#allocation5 + $0xc8] sm:$0xff]
    %v85 = vld [vmem:[#allocation5 + $0xd0] sm:$0xff]
    %v86 = vld [vmem:[#allocation5 + $0xd8] sm:$0xff]
    %v87 = vld [vmem:[#allocation5 + $0xe0] sm:$0xff]
    %v88 = vld [vmem:[#allocation5 + $0xe8] sm:$0xff]
    %v89 = vld [vmem:[#allocation5 + $0xf0] sm:$0xff]
    %v90 = vld [vmem:[#allocation5 + $0xf8] sm:$0xff]
    %v93 = vunpack.c.l.b16 %v57
    %v94 = vunpack.c.l.b16 %v58
    %v95 = vpack.c.b16 %v94, %v93
    %v129 = vunpack.c.l.b16 %v59
    %v130 = vunpack.c.h.b16 %v59
    %v131 = vunpack.c.l.b16 %v60
    %v132 = vunpack.c.h.b16 %v60
    %v133 = vunpack.c.l.b16 %v61
    %v134 = vunpack.c.h.b16 %v61
    %v135 = vunpack.c.l.b16 %v62
    %v136 = vunpack.c.h.b16 %v62
    %v137 = vunpack.c.l.b16 %v63
    %v138 = vunpack.c.h.b16 %v63
    %v139 = vunpack.c.l.b16 %v64
    %v140 = vunpack.c.h.b16 %v64
    %v141 = vunpack.c.l.b16 %v65
    %v142 = vunpack.c.h.b16 %v65
    %v143 = vunpack.c.l.b16 %v66
    %v144 = vunpack.c.h.b16 %v66
    %v145 = vunpack.c.l.b16 %v67
    %v146 = vunpack.c.h.b16 %v67
    %v147 = vunpack.c.l.b16 %v68
    %v148 = vunpack.c.h.b16 %v68
    %v149 = vunpack.c.l.b16 %v69
    %v150 = vunpack.c.h.b16 %v69
    %v151 = vunpack.c.l.b16 %v70
    %v152 = vunpack.c.h.b16 %v70
    %v153 = vunpack.c.l.b16 %v71
    %v154 = vunpack.c.h.b16 %v71
    %v155 = vunpack.c.l.b16 %v72
    %v156 = vunpack.c.h.b16 %v72
    %v157 = vunpack.c.l.b16 %v73
    %v158 = vunpack.c.h.b16 %v73
    %v159 = vunpack.c.l.b16 %v74
    %v160 = vunpack.c.h.b16 %v74
    %v161 = vunpack.c.l.b16 %v75
    %v162 = vunpack.c.h.b16 %v75
    %v163 = vunpack.c.l.b16 %v76
    %v164 = vunpack.c.h.b16 %v76
    %v165 = vunpack.c.l.b16 %v77
    %v166 = vunpack.c.h.b16 %v77
    %v167 = vunpack.c.l.b16 %v78
    %v168 = vunpack.c.h.b16 %v78
    %v169 = vunpack.c.l.b16 %v79
    %v170 = vunpack.c.h.b16 %v79
    %v171 = vunpack.c.l.b16 %v80
    %v172 = vunpack.c.h.b16 %v80
    %v173 = vunpack.c.l.b16 %v81
    %v174 = vunpack.c.h.b16 %v81
    %v175 = vunpack.c.l.b16 %v82
    %v176 = vunpack.c.h.b16 %v82
    %v177 = vunpack.c.l.b16 %v83
    %v178 = vunpack.c.h.b16 %v83
    %v179 = vunpack.c.l.b16 %v84
    %v180 = vunpack.c.h.b16 %v84
    %v181 = vunpack.c.l.b16 %v85
    %v182 = vunpack.c.h.b16 %v85
    %v183 = vunpack.c.l.b16 %v86
    %v184 = vunpack.c.h.b16 %v86
    %v185 = vunpack.c.l.b16 %v87
    %v186 = vunpack.c.h.b16 %v87
    %v187 = vunpack.c.l.b16 %v88
    %v188 = vunpack.c.h.b16 %v88
    %v189 = vunpack.c.l.b16 %v89
    %v190 = vunpack.c.h.b16 %v89
    %v191 = vunpack.c.l.b16 %v90
    %v192 = vunpack.c.h.b16 %v90
    %v193 = vpack.c.b16 %v133, %v129
    %v194 = vpack.c.b16 %v134, %v130
    %v195 = vpack.c.b16 %v135, %v131
    %v196 = vpack.c.b16 %v136, %v132
    %v197 = vpack.c.b16 %v141, %v137
    %v198 = vpack.c.b16 %v142, %v138
    %v199 = vpack.c.b16 %v143, %v139
    %v200 = vpack.c.b16 %v144, %v140
    %v201 = vpack.c.b16 %v149, %v145
    %v202 = vpack.c.b16 %v150, %v146
    %v203 = vpack.c.b16 %v151, %v147
    %v204 = vpack.c.b16 %v152, %v148
    %v205 = vpack.c.b16 %v157, %v153
    %v206 = vpack.c.b16 %v158, %v154
    %v207 = vpack.c.b16 %v159, %v155
    %v208 = vpack.c.b16 %v160, %v156
    %v209 = vpack.c.b16 %v165, %v161
    %v210 = vpack.c.b16 %v166, %v162
    %v211 = vpack.c.b16 %v167, %v163
    %v212 = vpack.c.b16 %v168, %v164
    %v213 = vpack.c.b16 %v173, %v169
    %v214 = vpack.c.b16 %v174, %v170
    %v215 = vpack.c.b16 %v175, %v171
    %v216 = vpack.c.b16 %v176, %v172
    %v217 = vpack.c.b16 %v181, %v177
    %v218 = vpack.c.b16 %v182, %v178
    %v219 = vpack.c.b16 %v183, %v179
    %v220 = vpack.c.b16 %v184, %v180
    %v221 = vpack.c.b16 %v189, %v185
    %v222 = vpack.c.b16 %v190, %v186
    %v223 = vpack.c.b16 %v191, %v187
    %v224 = vpack.c.b16 %v192, %v188
    %257 = vmatprep.subr.bf16.mxu0 %v222
    %258 = vmatpush1.bf16.msra.mxu0 %v221
    %259 = vmatprep.subr.bf16.mxu0 %v218
    %260 = vmatpush1.bf16.msra.mxu0 %v217
    %261 = vmatprep.subr.bf16.mxu0 %v214
    %262 = vmatpush1.bf16.msra.mxu0 %v213
    %263 = vmatprep.subr.bf16.mxu0 %v210
    %264 = vmatpush1.bf16.msra.mxu0 %v209
    %265 = vmatprep.subr.bf16.mxu0 %v206
    %266 = vmatpush1.bf16.msra.mxu0 %v205
    %267 = vmatprep.subr.bf16.mxu0 %v202
    %268 = vmatpush1.bf16.msra.mxu0 %v201
    %269 = vmatprep.subr.bf16.mxu0 %v198
    %270 = vmatpush1.bf16.msra.mxu0 %v197
    %271 = vmatprep.subr.bf16.mxu0 %v194
    %272 = vmatpush1.bf16.msra.mxu0 %v193
    %273 = vmatprep.subr.bf16.mxu0 0
    %274 = vmatpush2.bf16.msra.mxu0 0
    %275 = vmatprep.subr.bf16.mxu0 0
    %276 = vmatpush2.bf16.msra.mxu0 0
    %277 = vmatprep.subr.bf16.mxu0 0
    %278 = vmatpush2.bf16.msra.mxu0 0
    %279 = vmatprep.subr.bf16.mxu0 0
    %280 = vmatpush2.bf16.msra.mxu0 0
    %281 = vmatprep.subr.bf16.mxu0 0
    %282 = vmatpush2.bf16.msra.mxu0 0
    %283 = vmatprep.subr.bf16.mxu0 0
    %284 = vmatpush2.bf16.msra.mxu0 0
    %285 = vmatprep.subr.bf16.mxu0 0
    %286 = vmatpush2.bf16.msra.mxu0 0
    %287 = vmatprep.subr.bf16.mxu0 0
    %288 = vmatpush2.bf16.msra.mxu0 0
    %289 = vmatprep.mubr.bf16.mxu0 0
    %290 = vmatmul.mubr.bf16.gmra.mxu0 %v95
    %v291 = vpop.f32.mrf.mxu0
    %v292 = vadd.f32 0.0, %v291
    %v293 = vpop.f32.mrf.mxu0
    %v294 = vadd.f32 0.0, %v293
    %v295 = vpop.f32.mrf.mxu0
    %v296 = vadd.f32 0.0, %v295
    %v297 = vpop.f32.mrf.mxu0
    %v298 = vadd.f32 0.0, %v297
    %299 = vdwg.mxu0
    %300 = vmatprep.subr.bf16.mxu0 %v224
    %301 = vmatpush1.bf16.msra.mxu0 %v223
    %302 = vmatprep.subr.bf16.mxu0 %v220
    %303 = vmatpush1.bf16.msra.mxu0 %v219
    %304 = vmatprep.subr.bf16.mxu0 %v216
    %305 = vmatpush1.bf16.msra.mxu0 %v215
    %306 = vmatprep.subr.bf16.mxu0 %v212
    %307 = vmatpush1.bf16.msra.mxu0 %v211
    %308 = vmatprep.subr.bf16.mxu0 %v208
    %309 = vmatpush1.bf16.msra.mxu0 %v207
    %310 = vmatprep.subr.bf16.mxu0 %v204
    %311 = vmatpush1.bf16.msra.mxu0 %v203
    %312 = vmatprep.subr.bf16.mxu0 %v200
    %313 = vmatpush1.bf16.msra.mxu0 %v199
    %314 = vmatprep.subr.bf16.mxu0 %v196
    %315 = vmatpush1.bf16.msra.mxu0 %v195
    %316 = vmatprep.subr.bf16.mxu0 0
    %317 = vmatpush2.bf16.msra.mxu0 0
    %318 = vmatprep.subr.bf16.mxu0 0
    %319 = vmatpush2.bf16.msra.mxu0 0
    %320 = vmatprep.subr.bf16.mxu0 0
    %321 = vmatpush2.bf16.msra.mxu0 0
    %322 = vmatprep.subr.bf16.mxu0 0
    %323 = vmatpush2.bf16.msra.mxu0 0
    %324 = vmatprep.subr.bf16.mxu0 0
    %325 = vmatpush2.bf16.msra.mxu0 0
    %326 = vmatprep.subr.bf16.mxu0 0
    %327 = vmatpush2.bf16.msra.mxu0 0
    %328 = vmatprep.subr.bf16.mxu0 0
    %329 = vmatpush2.bf16.msra.mxu0 0
    %330 = vmatprep.subr.bf16.mxu0 0
    %331 = vmatpush2.bf16.msra.mxu0 0
    %332 = vmatprep.mubr.bf16.mxu0 0
    %333 = vmatmul.mubr.bf16.gmra.mxu0 %v95
    %v334 = vpop.f32.mrf.mxu0
    %v335 = vadd.f32 0.0, %v334
    %v336 = vpop.f32.mrf.mxu0
    %v337 = vadd.f32 0.0, %v336
    %v338 = vpop.f32.mrf.mxu0
    %v339 = vadd.f32 0.0, %v338
    %v340 = vpop.f32.mrf.mxu0
    %v341 = vadd.f32 0.0, %v340
    %342 = vdwg.mxu0
    %v343 = vxor.u32 %v292, 2147483648
    %v344 = vxor.u32 %v294, 2147483648
    %v345 = vxor.u32 %v296, 2147483648
    %v346 = vxor.u32 %v298, 2147483648
    %v347 = vmul.f32 %v343, 1.442695
    %v348 = vpow.pop %v347
    %v349 = vmul.f32 %v344, 1.442695
    %v350 = vpow.pop %v349
    %v351 = vmul.f32 %v345, 1.442695
    %v352 = vpow.pop %v351
    %v353 = vmul.f32 %v346, 1.442695
    %v354 = vpow.pop %v353
    %v355 = vadd.f32 %v348, 1.0
    %v356 = vadd.f32 %v350, 1.0
    %v357 = vadd.f32 %v352, 1.0
    %v358 = vadd.f32 %v354, 1.0
    %v359 = vrcp.pop %v355
    %v360 = vmul.f32 1.0, %v359
    %v361 = vrcp.pop %v356
    %v362 = vmul.f32 1.0, %v361
    %v363 = vrcp.pop %v357
    %v364 = vmul.f32 1.0, %v363
    %v365 = vrcp.pop %v358
    %v366 = vmul.f32 1.0, %v365
    %v367 = vmul.f32 %v292, %v360
    %v368 = vmul.f32 %v294, %v362
    %v369 = vmul.f32 %v296, %v364
    %v370 = vmul.f32 %v298, %v366
    %v371 = vmul.f32 %v367, %v335
    %v372 = vmul.f32 %v368, %v337
    %v373 = vmul.f32 %v369, %v339
    %v374 = vmul.f32 %v370, %v341
    %v375 = vpack.c.bf16 %v373, %v371
    %v376 = vpack.c.bf16 %v374, %v372
    %v377 = vld [vmem:[#allocation7] sm:$0xf]
    %v378 = vld [vmem:[#allocation7 + $0x4] sm:$0xf]
    %v379 = vld [vmem:[#allocation7 + $0x8] sm:$0xf]
    %v380 = vld [vmem:[#allocation7 + $0xc] sm:$0xf]
    %v381 = vld [vmem:[#allocation7 + $0x10] sm:$0xf]
    %v382 = vld [vmem:[#allocation7 + $0x14] sm:$0xf]
    %v383 = vld [vmem:[#allocation7 + $0x18] sm:$0xf]
    %v384 = vld [vmem:[#allocation7 + $0x1c] sm:$0xf]
    %v385 = vld [vmem:[#allocation7 + $0x20] sm:$0xf]
    %v386 = vld [vmem:[#allocation7 + $0x24] sm:$0xf]
    %v387 = vld [vmem:[#allocation7 + $0x28] sm:$0xf]
    %v388 = vld [vmem:[#allocation7 + $0x2c] sm:$0xf]
    %v389 = vld [vmem:[#allocation7 + $0x30] sm:$0xf]
    %v390 = vld [vmem:[#allocation7 + $0x34] sm:$0xf]
    %v391 = vld [vmem:[#allocation7 + $0x38] sm:$0xf]
    %v392 = vld [vmem:[#allocation7 + $0x3c] sm:$0xf]
    %v393 = vld [vmem:[#allocation7 + $0x40] sm:$0xf]
    %v394 = vld [vmem:[#allocation7 + $0x44] sm:$0xf]
    %v395 = vld [vmem:[#allocation7 + $0x48] sm:$0xf]
    %v396 = vld [vmem:[#allocation7 + $0x4c] sm:$0xf]
    %v397 = vld [vmem:[#allocation7 + $0x50] sm:$0xf]
    %v398 = vld [vmem:[#allocation7 + $0x54] sm:$0xf]
    %v399 = vld [vmem:[#allocation7 + $0x58] sm:$0xf]
    %v400 = vld [vmem:[#allocation7 + $0x5c] sm:$0xf]
    %v401 = vld [vmem:[#allocation7 + $0x60] sm:$0xf]
    %v402 = vld [vmem:[#allocation7 + $0x64] sm:$0xf]
    %v403 = vld [vmem:[#allocation7 + $0x68] sm:$0xf]
    %v404 = vld [vmem:[#allocation7 + $0x6c] sm:$0xf]
    %v405 = vld [vmem:[#allocation7 + $0x70] sm:$0xf]
    %v406 = vld [vmem:[#allocation7 + $0x74] sm:$0xf]
    %v407 = vld [vmem:[#allocation7 + $0x78] sm:$0xf]
    %v408 = vld [vmem:[#allocation7 + $0x7c] sm:$0xf]
    %v441 = vunpack.c.l.b16 %v377
    %v442 = vunpack.c.l.b16 %v378
    %v443 = vunpack.c.l.b16 %v379
    %v444 = vunpack.c.l.b16 %v380
    %v445 = vunpack.c.l.b16 %v381
    %v446 = vunpack.c.l.b16 %v382
    %v447 = vunpack.c.l.b16 %v383
    %v448 = vunpack.c.l.b16 %v384
    %v449 = vunpack.c.l.b16 %v385
    %v450 = vunpack.c.l.b16 %v386
    %v451 = vunpack.c.l.b16 %v387
    %v452 = vunpack.c.l.b16 %v388
    %v453 = vunpack.c.l.b16 %v389
    %v454 = vunpack.c.l.b16 %v390
    %v455 = vunpack.c.l.b16 %v391
    %v456 = vunpack.c.l.b16 %v392
    %v457 = vunpack.c.l.b16 %v393
    %v458 = vunpack.c.l.b16 %v394
    %v459 = vunpack.c.l.b16 %v395
    %v460 = vunpack.c.l.b16 %v396
    %v461 = vunpack.c.l.b16 %v397
    %v462 = vunpack.c.l.b16 %v398
    %v463 = vunpack.c.l.b16 %v399
    %v464 = vunpack.c.l.b16 %v400
    %v465 = vunpack.c.l.b16 %v401
    %v466 = vunpack.c.l.b16 %v402
    %v467 = vunpack.c.l.b16 %v403
    %v468 = vunpack.c.l.b16 %v404
    %v469 = vunpack.c.l.b16 %v405
    %v470 = vunpack.c.l.b16 %v406
    %v471 = vunpack.c.l.b16 %v407
    %v472 = vunpack.c.l.b16 %v408
    %v473 = vpack.c.b16 %v442, %v441
    %v474 = vpack.c.b16 %v444, %v443
    %v475 = vpack.c.b16 %v446, %v445
    %v476 = vpack.c.b16 %v448, %v447
    %v477 = vpack.c.b16 %v450, %v449
    %v478 = vpack.c.b16 %v452, %v451
    %v479 = vpack.c.b16 %v454, %v453
    %v480 = vpack.c.b16 %v456, %v455
    %v481 = vpack.c.b16 %v458, %v457
    %v482 = vpack.c.b16 %v460, %v459
    %v483 = vpack.c.b16 %v462, %v461
    %v484 = vpack.c.b16 %v464, %v463
    %v485 = vpack.c.b16 %v466, %v465
    %v486 = vpack.c.b16 %v468, %v467
    %v487 = vpack.c.b16 %v470, %v469
    %v488 = vpack.c.b16 %v472, %v471
    %505 = vmatprep.subr.bf16.mxu0 0
    %506 = vmatpush1.bf16.msra.mxu0 %v480
    %507 = vmatprep.subr.bf16.mxu0 0
    %508 = vmatpush1.bf16.msra.mxu0 %v479
    %509 = vmatprep.subr.bf16.mxu0 0
    %510 = vmatpush1.bf16.msra.mxu0 %v478
    %511 = vmatprep.subr.bf16.mxu0 0
    %512 = vmatpush1.bf16.msra.mxu0 %v477
    %513 = vmatprep.subr.bf16.mxu0 0
    %514 = vmatpush1.bf16.msra.mxu0 %v476
    %515 = vmatprep.subr.bf16.mxu0 0
    %516 = vmatpush1.bf16.msra.mxu0 %v475
    %517 = vmatprep.subr.bf16.mxu0 0
    %518 = vmatpush1.bf16.msra.mxu0 %v474
    %519 = vmatprep.subr.bf16.mxu0 0
    %520 = vmatpush1.bf16.msra.mxu0 %v473
    %521 = vmatprep.subr.bf16.mxu0 0
    %522 = vmatpush2.bf16.msra.mxu0 %v488
    %523 = vmatprep.subr.bf16.mxu0 0
    %524 = vmatpush2.bf16.msra.mxu0 %v487
    %525 = vmatprep.subr.bf16.mxu0 0
    %526 = vmatpush2.bf16.msra.mxu0 %v486
    %527 = vmatprep.subr.bf16.mxu0 0
    %528 = vmatpush2.bf16.msra.mxu0 %v485
    %529 = vmatprep.subr.bf16.mxu0 0
    %530 = vmatpush2.bf16.msra.mxu0 %v484
    %531 = vmatprep.subr.bf16.mxu0 0
    %532 = vmatpush2.bf16.msra.mxu0 %v483
    %533 = vmatprep.subr.bf16.mxu0 0
    %534 = vmatpush2.bf16.msra.mxu0 %v482
    %535 = vmatprep.subr.bf16.mxu0 0
    %536 = vmatpush2.bf16.msra.mxu0 %v481
    %537 = vmatprep.mubr.bf16.mxu0 %v376
    %538 = vmatmul.mubr.bf16.gmra.mxu0 %v375
    %v539 = vpop.f32.mrf.mxu0
    %v540 = vadd.f32 0.0, %v539
    %v541 = vpop.f32.mrf.mxu0
    %v542 = vpop.f32.mrf.mxu0
    %v543 = vadd.f32 0.0, %v542
    %v544 = vpop.f32.mrf.mxu0
    %545 = vdwg.mxu0
    %546 = vst [vmem:[#allocation8] sm:$0xff] %v540
    %547 = vst [vmem:[#allocation8 + $0x8] sm:$0xff] %v543
    // Predicated region
    $region26: #{tpu_custom_call.1} parent=1 // pred_check
      _
    $region27: #{tpu_custom_call.1} parent=1 // pred_check_branch
      %549 = sbr.rel (0) target = $region29
    $region28: #{tpu_custom_call.1} parent=1 // pred_region
      %s551 = ssub.s32 256, 256
      %552 = vsyncadd [#allocation4], %s551
      %s553 = sshll.u32 [#allocation8], 4
      %s554 = int_to_ptr.vmem [resolvable:$true] %s553
      %559 = dma.vmem_to_hbm [thread:$0]  %s554, 256, %s3, [#allocation4], 128, 128, 8
    $region29: #{tpu_custom_call.1} parent=1 // pred_fallthru
      _
    // Predicated region
    $region30: #{tpu_custom_call.1} parent=1 // pred_check
      _
    $region31: #{tpu_custom_call.1} parent=1 // pred_check_branch
      %561 = sbr.rel (0) target = $region33
    $region32: #{tpu_custom_call.1} parent=1 // pred_region
      %562 = dma.done [#allocation4], 256
    $region33: #{tpu_custom_call.1} parent=1 // pred_fallthru
      _
    %563 = vsyncpa [#allocation3], 1
    %564 = vsyncpa [#allocation6], 1
    %565 = vsyncpa [#allocation4], 1

</llo_original>
